<compile_context>
chip_gen: v7x
topology: tpu7x:2x2x1
jax: 0.10.0
libtpu: 0.0.40
codegen_flags: <defaults>
</compile_context>

<pallas_src>
import functools

import jax
import jax.numpy as jnp
from jax.experimental import pallas as pl
from jax.experimental.pallas import tpu as pltpu

_MIB = 1 << 20


def _round_up(x, m):
    return (x + m - 1) // m * m


def _cdiv(a, b):
    return -(-a // b)


def _divisors(n):
    return [d for d in range(1, n + 1) if n % d == 0]


def _vmem_capacity_bytes():
    try:
        return int(pltpu.get_tpu_info().vmem_capacity_bytes)
    except Exception:
        return 64 * _MIB  # conservative (v7x-sized) fallback


# ---------------------------------------------------------------------------
# Fused single-pass kernel (whole groups fit in one block).
# ---------------------------------------------------------------------------
def _group_norm_kernel(x_ref, w_ref, b_ref, o_ref, *, eps, inv_n, inv_nm1):
    """x_ref: (Nb, Gb, Cg, HW) or (Nb, Gb, L); w_ref/b_ref: x block minus Nb."""
    x = x_ref[...].astype(jnp.float32)

    # Single pass: sum and sum-of-squares per (image, group).
    s = jnp.sum(x, axis=-1, keepdims=True)          # lane reduce
    ss = jnp.sum(x * x, axis=-1, keepdims=True)
    if x.ndim == 4:                                  # fold the channel axis too
        s = jnp.sum(s, axis=2, keepdims=True)        # sublane reduce
        ss = jnp.sum(ss, axis=2, keepdims=True)

    mean = s * inv_n
    # Unbiased variance (the module calls Tensor.var(): correction=1):
    #   var = (sum(x^2) - n*mean^2) / (n - 1),  with n*mean^2 == mean*s.
    # Clamp at 0: the E[x^2]-E[x]^2 form can go slightly negative from
    # cancellation when |mean| >> std, and rsqrt(negative) would give NaN.
    var = jnp.maximum((ss - mean * s) * inv_nm1, 0.0)
    inv_std = jax.lax.rsqrt(var + eps)               # EUP slot, ~free

    w = w_ref[...].astype(jnp.float32)
    b = b_ref[...].astype(jnp.float32)
    # Fold normalize + affine into one FMA: (x - mean) * inv_std * w + b.
    scale = inv_std * w
    shift = b - mean * scale
    o_ref[...] = (x * scale + shift).astype(o_ref.dtype)


# ---------------------------------------------------------------------------
# Chunked two-pass kernels (groups too large for a single fused block).
# ---------------------------------------------------------------------------
def _gn_stats_kernel(x_ref, mean_ref, rstd_ref, s_acc, ss_acc, *,
                     eps, inv_n, inv_nm1, L, Lc):
    """Accumulate per-group sum/sumsq over lane chunks; x_ref: (Gb, Lc)."""
    c = pl.program_id(2)

    @pl.when(c == 0)
    def _():
        s_acc[...] = jnp.zeros_like(s_acc)
        ss_acc[...] = jnp.zeros_like(ss_acc)

    x = x_ref[...].astype(jnp.float32)
    if L % Lc != 0:  # mask the ragged tail of the last chunk
        col = jax.lax.broadcasted_iota(jnp.int32, x.shape, 1) + c * Lc
        x = jnp.where(col < L, x, 0.0)

    s_acc[...] += jnp.sum(x, axis=-1, keepdims=True)
    ss_acc[...] += jnp.sum(x * x, axis=-1, keepdims=True)

    @pl.when(c == pl.num_programs(2) - 1)
    def _():
        mean = s_acc[...] * inv_n
        var = jnp.maximum((ss_acc[...] - mean * s_acc[...]) * inv_nm1, 0.0)
        mean_ref[...] = mean
        rstd_ref[...] = jax.lax.rsqrt(var + eps)


def _gn_apply_kernel(x_ref, w_ref, b_ref, mean_ref, rstd_ref, o_ref):
    """Chunked normalize + affine; x/w/b/o: (Gb, Lc), mean/rstd: (Gb, 1)."""
    x = x_ref[...].astype(jnp.float32)
    scale = rstd_ref[...] * w_ref[...].astype(jnp.float32)
    shift = b_ref[...].astype(jnp.float32) - mean_ref[...] * scale
    # Ragged last chunk: Pallas clamps the block write-back to the array
    # bounds, so out-of-range lanes are dropped.
    o_ref[...] = (x * scale + shift).astype(o_ref.dtype)


def _pick_chunk(L, max_chunk):
    """Chunk length along the collapsed group (lane) axis."""
    max_chunk = min(max_chunk, L)
    if max_chunk >= L:
        return L
    # Prefer an exact divisor of L that is a multiple of 128: no ragged chunk.
    floor = max(128, (max_chunk // 4) // 128 * 128)
    d = (max_chunk // 128) * 128
    while d >= floor:
        if L % d == 0:
            return d
        d -= 128
    return max((max_chunk // 128) * 128, 128)        # ragged; stats kernel masks


def _group_norm_split(x_g, w_full, b_full, eps, inv_n, inv_nm1,
                      budget_bytes, vmem_limit):
    """Two-pass path. x_g: (N, G, L); w_full/b_full: (G, L)."""
    N, G, L = x_g.shape
    x_item = jnp.dtype(x_g.dtype).itemsize
    w_item = jnp.dtype(w_full.dtype).itemsize

    Gb = 8 if G % 8 == 0 else G                      # sublane-dense when possible
    gpad = _round_up(Gb, 8)
    # Per chunk element: double-buffered x in/out + w + b blocks + fp32 temps.
    per_elem = 4 * x_item + 4 * w_item + 8
    max_chunk = max(budget_bytes // (gpad * per_elem), 128)
    Lc = _pick_chunk(L, max_chunk)
    n_chunks = _cdiv(L, Lc)

    stats_kernel = functools.partial(
        _gn_stats_kernel, eps=eps, inv_n=inv_n, inv_nm1=inv_nm1, L=L, Lc=Lc)
    stats_shape = jax.ShapeDtypeStruct((N, G, 1), jnp.float32)
    stats_spec = pl.BlockSpec((None, Gb, 1), lambda n, gb, c: (n, gb, 0))
    mean, rstd = pl.pallas_call(
        stats_kernel,
        out_shape=(stats_shape, stats_shape),
        grid_spec=pltpu.PrefetchScalarGridSpec(
            num_scalar_prefetch=0,
            grid=(N, G // Gb, n_chunks),
            in_specs=[pl.BlockSpec((None, Gb, Lc), lambda n, gb, c: (n, gb, c))],
            out_specs=(stats_spec, stats_spec),
            scratch_shapes=[pltpu.VMEM((Gb, 1), jnp.float32),
                            pltpu.VMEM((Gb, 1), jnp.float32)],
        ),
        compiler_params=pltpu.CompilerParams(
            dimension_semantics=("parallel", "parallel", "arbitrary"),
            vmem_limit_bytes=vmem_limit,
        ),
    )(x_g)

    x_spec = pl.BlockSpec((None, Gb, Lc), lambda gb, c, n: (n, gb, c))
    wb_spec = pl.BlockSpec((Gb, Lc), lambda gb, c, n: (gb, c))
    st_spec = pl.BlockSpec((None, Gb, 1), lambda gb, c, n: (n, gb, 0))
    out = pl.pallas_call(
        _gn_apply_kernel,
        out_shape=jax.ShapeDtypeStruct(x_g.shape, x_g.dtype),
        grid_spec=pltpu.PrefetchScalarGridSpec(
            num_scalar_prefetch=0,
            # weight/bias block index is independent of n (innermost), so they
            # are fetched once per (group-block, chunk), not once per image.
            grid=(G // Gb, n_chunks, N),
            in_specs=[x_spec, wb_spec, wb_spec, st_spec, st_spec],
            out_specs=x_spec,
        ),
        compiler_params=pltpu.CompilerParams(
            dimension_semantics=("parallel", "parallel", "parallel"),
            vmem_limit_bytes=vmem_limit,
        ),
    )(x_g, w_full, b_full, mean, rstd)
    return out


# ---------------------------------------------------------------------------
# Wrapper
# ---------------------------------------------------------------------------
def group_norm(x, weight, bias, num_groups=32, eps=1e-5, *, max_block_bytes=None):
    """GroupNorm forward.  x: (N, C, H, W); weight/bias: (1, C, 1, 1).

    max_block_bytes: optional override of the per-step VMEM working-set budget
    (mainly a test hook to force the chunked fallback path).
    """
    N, C, H, W = x.shape
    G = int(num_groups)
    assert C % G == 0
    Cg = C // G
    HW = H * W
    L = Cg * HW                        # elements reduced per (image, group)

    eps = float(eps)
    inv_n = 1.0 / float(L)
    # Unbiased variance (Tensor.var default).  For L == 1 torch would give NaN;
    # we return a finite result instead.
    inv_nm1 = 1.0 / float(L - 1) if L > 1 else 0.0

    x_item = jnp.dtype(x.dtype).itemsize
    w_item = jnp.dtype(weight.dtype).itemsize

    # Generation-aware scoped-VMEM target (always set explicitly):
    #   v5e/v6e (128 MiB physical) -> 64 MiB;  v7x (64 MiB) -> 48 MiB.
    vmem_cap = _vmem_capacity_bytes()
    vmem_limit = int(min(vmem_cap * 3 // 4, 64 * _MIB))
    if max_block_bytes is not None:
        budget = int(max_block_bytes)
    else:
        budget = vmem_limit - 2 * _MIB            # headroom for small buffers

    # Layout: keep (Cg, HW) as (sublane, lane) only when it is already dense;
    # otherwise collapse the whole group onto the lane axis (lane-dense stores)
    # and pre-broadcast weight/bias to (G, L).
    use_4d = (HW % 128 == 0) and (Cg % 8 == 0)

    if use_4d:
        gb_candidates = _divisors(G)

        def block_bytes(nb, gb):
            x_elems = nb * gb * Cg * HW
            wb_elems = gb * Cg * 128              # (gb, Cg, 1) padded to a lane tile
            # double-buffered in+out + fp32 upcast / x*x temps + 2x2 w/b buffers
            return x_elems * (4 * x_item + 8) + wb_elems * (4 * w_item)
    else:
        L_pad = _round_up(L, 128)
        gb_candidates = [d for d in _divisors(G) if d % 8 == 0 or d == G]

        def block_bytes(nb, gb):
            gpad = _round_up(gb, 8)
            x_elems = nb * gpad * L_pad
            wb_elems = gpad * L_pad
            return x_elems * (4 * x_item + 8) + wb_elems * (4 * w_item)

    gb_fit = [g for g in gb_candidates if block_bytes(1, g) <= budget]

    if not gb_fit:
        # A single group block does not fit the budget (e.g. very large H*W on
        # v7x's 64 MiB VMEM): chunked two-pass fallback.
        x_g = x.reshape(N, G, L)
        w_full = jnp.broadcast_to(weight.reshape(G, Cg, 1), (G, Cg, HW)).reshape(G, L)
        b_full = jnp.broadcast_to(bias.reshape(G, Cg, 1), (G, Cg, HW)).reshape(G, L)
        out = _group_norm_split(x_g, w_full, b_full, eps, inv_n, inv_nm1,
                                budget, vmem_limit)
        return out.reshape(N, C, H, W)

    # Fused path: largest group-block that fits, then largest batch-block.
    Gb = max(gb_fit)
    Nb = max(d for d in _divisors(N) if block_bytes(d, Gb) <= budget)

    # Guarantee >= 2 grid steps when possible so both v7x TensorCores get work.
    if (G // Gb) * (N // Nb) < 2:
        if N > 1:
            Nb = max(d for d in _divisors(N) if d < N)
        else:
            smaller = [g for g in gb_candidates if g < G]
            if smaller:
                Gb = max(smaller)
            # TODO(synk): N == 1 with a single allowed group block still leaves
            # one v7x core idle; an extra spatial-split grid axis would fix it.

    kernel = functools.partial(_group_norm_kernel, eps=eps, inv_n=inv_n,
                               inv_nm1=inv_nm1)
    grid = (G // Gb, N // Nb)

    if use_4d:
        x_g = x.reshape(N, G, Cg, HW)
        w_g = weight.reshape(G, Cg, 1)
        b_g = bias.reshape(G, Cg, 1)
        x_spec = pl.BlockSpec((Nb, Gb, Cg, HW), lambda gb, nb: (nb, gb, 0, 0))
        wb_spec = pl.BlockSpec((Gb, Cg, 1), lambda gb, nb: (gb, 0, 0))
    else:
        x_g = x.reshape(N, G, L)
        w_g = jnp.broadcast_to(weight.reshape(G, Cg, 1), (G, Cg, HW)).reshape(G, L)
        b_g = jnp.broadcast_to(bias.reshape(G, Cg, 1), (G, Cg, HW)).reshape(G, L)
        x_spec = pl.BlockSpec((Nb, Gb, L), lambda gb, nb: (nb, gb, 0))
        wb_spec = pl.BlockSpec((Gb, L), lambda gb, nb: (gb, 0))

    out = pl.pallas_call(
        kernel,
        out_shape=jax.ShapeDtypeStruct(x_g.shape, x.dtype),
        grid_spec=pltpu.PrefetchScalarGridSpec(
            num_scalar_prefetch=0,
            # Group-block axis outermost so the weight/bias block index is
            # constant across the inner batch axis (no re-fetch).
            grid=grid,
            in_specs=[x_spec, wb_spec, wb_spec],
            out_specs=x_spec,
        ),
        compiler_params=pltpu.CompilerParams(
            dimension_semantics=("parallel", "parallel"),
            vmem_limit_bytes=vmem_limit,
        ),
    )(x_g, w_g, b_g)
    return out.reshape(N, C, H, W)


def group_norm_ref(x, weight, bias, num_groups=32, eps=1e-5):
    """Pure-JAX reference mirroring the PyTorch module exactly."""
    N, C, H, W = x.shape
    G = num_groups
    xr = x.reshape(N, G, -1).astype(jnp.float32)
    mean = jnp.mean(xr, axis=-1, keepdims=True)
    var = jnp.var(xr, axis=-1, keepdims=True, ddof=1)  # unbiased, like .var()
    xr = (xr - mean) / jnp.sqrt(var + eps)
    xr = xr.reshape(N, C, H, W)
    return (xr * weight + bias).astype(x.dtype)


if __name__ == "__main__":
    key = jax.random.PRNGKey(0)
    k1, k2, k3 = jax.random.split(key, 3)

    # --- Test 1: primary shape (collapsed lane-dense layout, fused path) ----
    N, C, H, W = 2, 4, 16, 16
    G = 2
    x = jax.random.normal(k1, (N, C, H, W), dtype=jnp.float32)
    weight = (jnp.ones((1, C, 1, 1), jnp.float32)
              + 0.1 * jnp.arange(C, dtype=jnp.float32).reshape(1, C, 1, 1))
    bias = 0.05 * jnp.arange(C, dtype=jnp.float32).reshape(1, C, 1, 1)

    out = jax.block_until_ready(group_norm(x, weight, bias, num_groups=G))
    ref = group_norm_ref(x, weight, bias, num_groups=G)
    assert out.shape == (N, C, H, W)
    assert jnp.allclose(out, ref, atol=1e-5, rtol=1e-5), (
        float(jnp.max(jnp.abs(out - ref))))

    # --- Test 2: (Cg, HW) sublane/lane layout, bf16 input (fused path) ------
    N2, C2, H2, W2, G2 = 2, 16, 16, 16, 2            # Cg=8, HW=256
    x2 = jax.random.normal(k2, (N2, C2, H2, W2), dtype=jnp.bfloat16)
    w2 = (jnp.ones((1, C2, 1, 1), jnp.float32)
          + 0.1 * jnp.arange(C2, dtype=jnp.float32).reshape(1, C2, 1, 1) / C2)
    b2 = 0.05 * jnp.arange(C2, dtype=jnp.float32).reshape(1, C2, 1, 1) / C2
    out2 = jax.block_until_ready(group_norm(x2, w2, b2, num_groups=G2))
    ref2 = group_norm_ref(x2, w2, b2, num_groups=G2)
    d2 = jnp.max(jnp.abs(out2.astype(jnp.float32) - ref2.astype(jnp.float32)))
    assert jnp.allclose(out2.astype(jnp.float32), ref2.astype(jnp.float32),
                        atol=0.1, rtol=0.05), float(d2)

    # --- Test 3: force the chunked two-pass (huge-group) fallback -----------
    N3, C3, H3, W3, G3 = 2, 8, 16, 16, 2             # Cg=4, L=1024 -> 8 chunks
    x3 = jax.random.normal(k3, (N3, C3, H3, W3), dtype=jnp.float32)
    w3 = (jnp.ones((1, C3, 1, 1), jnp.float32)
          + 0.1 * jnp.arange(C3, dtype=jnp.float32).reshape(1, C3, 1, 1))
    b3 = 0.05 * jnp.arange(C3, dtype=jnp.float32).reshape(1, C3, 1, 1)
    out3 = jax.block_until_ready(
        group_norm(x3, w3, b3, num_groups=G3, max_block_bytes=64 * 1024))
    ref3 = group_norm_ref(x3, w3, b3, num_groups=G3)
    assert jnp.allclose(out3, ref3, atol=1e-4, rtol=1e-4), (
        float(jnp.max(jnp.abs(out3 - ref3))))

    print("KERNEL_OK")
</pallas_src>

<mosaic_0001>
module attributes {stable_mosaic.version = 11 : i64} {
  func.func @_group_norm_kernel(%arg0: i32, %arg1: i32, %arg2: memref<1x2x512xf32, #tpu.memory_space<vmem>>, %arg3: memref<2x512xf32, #tpu.memory_space<vmem>>, %arg4: memref<2x512xf32, #tpu.memory_space<vmem>>, %arg5: memref<1x2x512xf32, #tpu.memory_space<vmem>>) attributes {dimension_semantics = [#tpu.dimension_semantics<parallel>, #tpu.dimension_semantics<parallel>], iteration_bounds = array<i64: 1, 2>, scalar_prefetch = 0 : i64, scratch_operands = 0 : i64, tpu.core_type = #tpu.core_type<tc>, window_params = [{transform_indices = @transform_0, window_bounds = array<i64: 1, 2, 512>}, {transform_indices = @transform_1, window_bounds = array<i64: 2, 512>}, {transform_indices = @transform_2, window_bounds = array<i64: 2, 512>}, {transform_indices = @transform_3, window_bounds = array<i64: 1, 2, 512>}]} {
    %c0 = arith.constant 0 : index
    %c0_0 = arith.constant 0 : index
    %c0_1 = arith.constant 0 : index
    %0 = vector.load %arg2[%c0, %c0_0, %c0_1] : memref<1x2x512xf32, #tpu.memory_space<vmem>>, vector<1x2x512xf32>
    %cst = arith.constant dense<0.000000e+00> : vector<1x2xf32>
    %1 = vector.multi_reduction <add>, %0, %cst [2] : vector<1x2x512xf32> to vector<1x2xf32>
    %2 = vector.shape_cast %1 : vector<1x2xf32> to vector<1x2x1xf32>
    %3 = arith.mulf %0, %0 : vector<1x2x512xf32>
    %cst_2 = arith.constant dense<0.000000e+00> : vector<1x2xf32>
    %4 = vector.multi_reduction <add>, %3, %cst_2 [2] : vector<1x2x512xf32> to vector<1x2xf32>
    %5 = vector.shape_cast %4 : vector<1x2xf32> to vector<1x2x1xf32>
    %cst_3 = arith.constant 0.001953125 : f32
    %6 = vector.broadcast %cst_3 : f32 to vector<1x2x1xf32>
    %7 = arith.mulf %2, %6 : vector<1x2x1xf32>
    %8 = arith.mulf %7, %2 : vector<1x2x1xf32>
    %9 = arith.subf %5, %8 : vector<1x2x1xf32>
    %cst_4 = arith.constant 0.00195694715 : f32
    %10 = vector.broadcast %cst_4 : f32 to vector<1x2x1xf32>
    %11 = arith.mulf %9, %10 : vector<1x2x1xf32>
    %cst_5 = arith.constant 0.000000e+00 : f32
    %12 = vector.broadcast %cst_5 : f32 to vector<1x2x1xf32>
    %13 = arith.maximumf %11, %12 : vector<1x2x1xf32>
    %cst_6 = arith.constant 9.99999974E-6 : f32
    %14 = vector.broadcast %cst_6 : f32 to vector<1x2x1xf32>
    %15 = arith.addf %13, %14 : vector<1x2x1xf32>
    %16 = math.rsqrt %15 : vector<1x2x1xf32>
    %c0_7 = arith.constant 0 : index
    %c0_8 = arith.constant 0 : index
    %17 = vector.load %arg3[%c0_7, %c0_8] : memref<2x512xf32, #tpu.memory_space<vmem>>, vector<2x512xf32>
    %c0_9 = arith.constant 0 : index
    %c0_10 = arith.constant 0 : index
    %18 = vector.load %arg4[%c0_9, %c0_10] : memref<2x512xf32, #tpu.memory_space<vmem>>, vector<2x512xf32>
    %19 = vector.shape_cast %17 : vector<2x512xf32> to vector<1x2x512xf32>
    %20 = vector.broadcast %16 : vector<1x2x1xf32> to vector<1x2x512xf32>
    %21 = arith.mulf %20, %19 : vector<1x2x512xf32>
    %22 = vector.broadcast %7 : vector<1x2x1xf32> to vector<1x2x512xf32>
    %23 = arith.mulf %22, %21 : vector<1x2x512xf32>
    %24 = vector.shape_cast %18 : vector<2x512xf32> to vector<1x2x512xf32>
    %25 = arith.subf %24, %23 : vector<1x2x512xf32>
    %26 = arith.mulf %0, %21 : vector<1x2x512xf32>
    %27 = arith.addf %26, %25 : vector<1x2x512xf32>
    %c0_11 = arith.constant 0 : index
    %c0_12 = arith.constant 0 : index
    %c0_13 = arith.constant 0 : index
    %28 = vector.load %arg5[%c0_11, %c0_12, %c0_13] : memref<1x2x512xf32, #tpu.memory_space<vmem>>, vector<1x2x512xf32>
    tpu.vector_store %arg5[%c0_11, %c0_12, %c0_13], %27 {strides = array<i32>} : memref<1x2x512xf32, #tpu.memory_space<vmem>>, vector<1x2x512xf32>,
    return
  }
  func.func @transform_0(%arg0: i32, %arg1: i32) -> (i32, i32, i32) {
    %c0_i32 = arith.constant 0 : i32
    %c0_i32_0 = arith.constant 0 : i32
    return %arg1, %arg0, %c0_i32 : i32, i32, i32
  }
  func.func @transform_1(%arg0: i32, %arg1: i32) -> (i32, i32) {
    %c0_i32 = arith.constant 0 : i32
    %c0_i32_0 = arith.constant 0 : i32
    return %arg0, %c0_i32 : i32, i32
  }
  func.func @transform_2(%arg0: i32, %arg1: i32) -> (i32, i32) {
    %c0_i32 = arith.constant 0 : i32
    %c0_i32_0 = arith.constant 0 : i32
    return %arg0, %c0_i32 : i32, i32
  }
  func.func @transform_3(%arg0: i32, %arg1: i32) -> (i32, i32, i32) {
    %c0_i32 = arith.constant 0 : i32
    %c0_i32_0 = arith.constant 0 : i32
    return %arg1, %arg0, %c0_i32 : i32, i32, i32
  }
}

</mosaic_0001>

<llo_original>
// kernel: tpu_custom_call.1
$region0: #{tpu_custom_call.1}
  #allocation0 [shape = 'u32[]', space=smem, size = 0x4, offset = 0x4, fixed_abs, tag = 'smem constant byte address 0x4 - core index']
  #allocation1 [shape = 'u32[144,128]{1,0:T(1,128)}', space=vmem, size = 0x12000, scoped, tag = 'internal scratch']
  %s0 = inlined_call_operand.hbm [shape: f32[2,2,512], index: 0, kind: input, shape index: {}]
  %s1 = inlined_call_operand.hbm [shape: f32[2,512], index: 1, kind: input, shape index: {}]
  %s2 = inlined_call_operand.hbm [shape: f32[2,512], index: 2, kind: input, shape index: {}]
  %s3 = inlined_call_operand.hbm [shape: f32[2,2,512], index: 3, kind: output, shape index: {}]
  %s4 = sld [smem:[#allocation0]]
  $region57: #{tpu_custom_call.1} parent=0
    _
  %s6 = ssub.s32 1, %s4
  %s7 = scalar_select 0, %s6, %s4
  $region1: #{tpu_custom_call.1} parent=0
    #allocation2 [shape = 'u8[8192]{0}', space=vmem, size = 0x2000, scoped, tag = 'input window, operand 0']
    #allocation3 [shape = 's32[2]{0}', space=sflag, size = 0x8, scoped, tag = 'scoped memory for tpu_custom_call.1']
    #allocation4 [shape = 's32[2]{0}', space=sflag, size = 0x8, scoped, tag = 'scoped memory for tpu_custom_call.1']
    #allocation5 [shape = 'u8[4096]{0}', space=vmem, size = 0x1000, scoped, tag = 'input window, operand 1, single buffered']
    #allocation6 [shape = 's32[1]{0}', space=sflag, size = 0x4, scoped, tag = 'scoped memory for tpu_custom_call.1']
    #allocation7 [shape = 'u8[4096]{0}', space=vmem, size = 0x1000, scoped, tag = 'input window, operand 2, single buffered']
    #allocation8 [shape = 'u8[8192]{0}', space=vmem, size = 0x2000, scoped, tag = 'output window, operand 0']
    %8 = vsyncpa [#allocation3], 0
    %s9 = scalar_lea.sflag [#allocation3], 1
    %10 = vsyncpa %s9, 0
    %11 = vsyncpa [#allocation6], 0
    %12 = vsyncpa [#allocation4], 0
    %s13 = scalar_lea.sflag [#allocation4], 1
    %14 = vsyncpa %s13, 0
    loop: start=0, step=1, limit=4
    $region2: #{tpu_custom_call.1} parent=1 // loop_pre_header
      _
    $region3: #{tpu_custom_call.1} parent=1 // loop_header
      %s16 = sphi 0, %s20
      %p17 = scmp.ge.s32.totalorder %s16, 4
      %s23 = sphi 0, %s35
      %s24 = sphi 0, %s31
      %s25 = sphi 0, %s23
      %s26 = sphi 0, %s24
      %s27 = sphi 0, %s25
      %s28 = sphi 0, %s26
      %s40 = sphi 0, %s42
      %s43 = sphi 0, %s40
      %s44 = sphi 0, %s43
      %s60 = sphi 0, %s44
      %s66 = sphi 0, %s68
      %s69 = sphi 0, %s66
      %s70 = sphi 0, %s69
      %s86 = sphi 0, %s70
      %s92 = sphi 0, %s94
      %s95 = sphi 0, %s92
      %s96 = sphi 0, %s95
      %s112 = sphi 0, %s96
      %s120 = sphi 0, %s122
      %s123 = sphi 0, %s120
      %s124 = sphi 0, %s123
      %s140 = sphi 0, %s124
    $region4: #{tpu_custom_call.1} parent=1 // loop_header_branch
      %19 = sbr.rel (%p17) target = $region8
    $region5: #{tpu_custom_call.1} parent=1 // loop_body
      %s21 = ssub.s32 %s16, 1
      %s22 = ssub.s32 %s16, 2
      %s29 = sadd.s32 1, %s24
      %p30 = scmp.ge.s32.totalorder %s29, 2
      %s31 = scalar_select %p30, 0, %s29
      %s32 = sadd.s32 1, %s23
      %s33 = scalar_select %p30, %s32, %s23
      %p34 = scmp.ge.s32.totalorder %s33, 1
      %s35 = scalar_select %p34, 0, %s33
      %s36 = ssub.s32 %s24, %s31
      %s37 = ssub.s32 %s23, %s35
      %s38 = sor.u32 %s36, %s37
      %p39 = scmp.eq.s32.totalorder %s38, 0
      %s41 = sadd.s32 %s40, 1
      %s42 = scalar_select %p39, %s40, %s41
      %p45 = pneg %p39
      %p46 = scmp.eq.s32.totalorder %s16, 1
      %p47 = por %p45, %p46
      %p48 = scmp.ne.s32.totalorder %s40, %s43
      %p49 = scmp.eq.s32.totalorder %s16, 0
      %p50 = por %p48, %p49
      %p51 = scmp.ne.s32.totalorder %s40, %s43
      %p52 = scmp.eq.s32.totalorder %s21, 1
      %p53 = por %p51, %p52
      %p54 = scmp.ne.s32.totalorder %s43, %s44
      %p55 = scmp.eq.s32.totalorder %s21, 0
      %p56 = por %p54, %p55
      %p57 = scmp.ne.s32.totalorder %s43, %s44
      %p58 = scmp.eq.s32.totalorder %s22, 1
      %p59 = por %p57, %p58
      %p61 = scmp.ne.s32.totalorder %s44, %s60
      %p62 = scmp.eq.s32.totalorder %s22, 0
      %p63 = por %p61, %p62
      %s64 = ssub.s32 %s23, %s35
      %p65 = scmp.eq.s32.totalorder %s64, 0
      %s67 = sadd.s32 %s66, 1
      %s68 = scalar_select %p65, %s66, %s67
      %p71 = pneg %p65
      %p72 = scmp.eq.s32.totalorder %s16, 1
      %p73 = por %p71, %p72
      %p74 = scmp.ne.s32.totalorder %s66, %s69
      %p75 = scmp.eq.s32.totalorder %s16, 0
      %p76 = por %p74, %p75
      %p77 = scmp.ne.s32.totalorder %s66, %s69
      %p78 = scmp.eq.s32.totalorder %s21, 1
      %p79 = por %p77, %p78
      %p80 = scmp.ne.s32.totalorder %s69, %s70
      %p81 = scmp.eq.s32.totalorder %s21, 0
      %p82 = por %p80, %p81
      %p83 = scmp.ne.s32.totalorder %s69, %s70
      %p84 = scmp.eq.s32.totalorder %s22, 1
      %p85 = por %p83, %p84
      %p87 = scmp.ne.s32.totalorder %s70, %s86
      %p88 = scmp.eq.s32.totalorder %s22, 0
      %p89 = por %p87, %p88
      %s90 = ssub.s32 %s23, %s35
      %p91 = scmp.eq.s32.totalorder %s90, 0
      %s93 = sadd.s32 %s92, 1
      %s94 = scalar_select %p91, %s92, %s93
      %p97 = pneg %p91
      %p98 = scmp.eq.s32.totalorder %s16, 1
      %p99 = por %p97, %p98
      %p100 = scmp.ne.s32.totalorder %s92, %s95
      %p101 = scmp.eq.s32.totalorder %s16, 0
      %p102 = por %p100, %p101
      %p103 = scmp.ne.s32.totalorder %s92, %s95
      %p104 = scmp.eq.s32.totalorder %s21, 1
      %p105 = por %p103, %p104
      %p106 = scmp.ne.s32.totalorder %s95, %s96
      %p107 = scmp.eq.s32.totalorder %s21, 0
      %p108 = por %p106, %p107
      %p109 = scmp.ne.s32.totalorder %s95, %s96
      %p110 = scmp.eq.s32.totalorder %s22, 1
      %p111 = por %p109, %p110
      %p113 = scmp.ne.s32.totalorder %s96, %s112
      %p114 = scmp.eq.s32.totalorder %s22, 0
      %p115 = por %p113, %p114
      %s116 = ssub.s32 %s24, %s31
      %s117 = ssub.s32 %s23, %s35
      %s118 = sor.u32 %s116, %s117
      %p119 = scmp.eq.s32.totalorder %s118, 0
      %s121 = sadd.s32 %s120, 1
      %s122 = scalar_select %p119, %s120, %s121
      %p125 = pneg %p119
      %p126 = scmp.eq.s32.totalorder %s16, 1
      %p127 = por %p125, %p126
      %p128 = scmp.ne.s32.totalorder %s120, %s123
      %p129 = scmp.eq.s32.totalorder %s16, 0
      %p130 = por %p128, %p129
      %p131 = scmp.ne.s32.totalorder %s120, %s123
      %p132 = scmp.eq.s32.totalorder %s21, 1
      %p133 = por %p131, %p132
      %p134 = scmp.ne.s32.totalorder %s123, %s124
      %p135 = scmp.eq.s32.totalorder %s21, 0
      %p136 = por %p134, %p135
      %p137 = scmp.ne.s32.totalorder %s123, %s124
      %p138 = scmp.eq.s32.totalorder %s22, 1
      %p139 = por %p137, %p138
      %p141 = scmp.ne.s32.totalorder %s124, %s140
      %p142 = scmp.eq.s32.totalorder %s22, 0
      %p143 = por %p141, %p142
      %p144 = scmp.le.s32.totalorder 1, %s16
      %p145 = scmp.lt.s32.totalorder %s16, 3
      %p146 = pnand %p144, %p145
      %p147 = pneg %p146
      // Predicated region
      $region9: #{tpu_custom_call.1} parent=5 // pred_check
        _
      $region10: #{tpu_custom_call.1} parent=5 // pred_check_branch
        %149 = sbr.rel (%p146) target = $region12
      $region11: #{tpu_custom_call.1} parent=5 // pred_region
        %s150 = ssub.s32 %s16, 1
        // Predicated region
        $region13: #{tpu_custom_call.1} parent=11 // pred_check
          %p151 = pneg %p82
        $region14: #{tpu_custom_call.1} parent=11 // pred_check_branch
          %153 = sbr.rel (%p151) target = $region16
        $region15: #{tpu_custom_call.1} parent=11 // pred_region
          %s155 = ssub.s32 128, 128
          %156 = vsyncadd [#allocation6], %s155
          %s157 = smul.addr %s25, 4
          %s158 = smul.addr %s157, 32
          %s159 = scalar_lea.hbm %s1, %s158
          %s161 = sshll.u32 [#allocation5], 4
          %s162 = int_to_ptr.vmem [resolvable:$true] %s161
          %164 = dma.hbm_to_vmem [thread:$0]  %s159, 128, %s162, [#allocation6]
        $region16: #{tpu_custom_call.1} parent=11 // pred_fallthru
          _
        // Predicated region
        $region17: #{tpu_custom_call.1} parent=11 // pred_check
          %p165 = pneg %p108
        $region18: #{tpu_custom_call.1} parent=11 // pred_check_branch
          %167 = sbr.rel (%p165) target = $region20
        $region19: #{tpu_custom_call.1} parent=11 // pred_region
          %s169 = ssub.s32 128, 128
          %170 = vsyncadd [#allocation6], %s169
          %s171 = smul.addr %s25, 4
          %s172 = smul.addr %s171, 32
          %s173 = scalar_lea.hbm %s2, %s172
          %s175 = sshll.u32 [#allocation7], 4
          %s176 = int_to_ptr.vmem [resolvable:$true] %s175
          %178 = dma.hbm_to_vmem [thread:$0]  %s173, 128, %s176, [#allocation6]
        $region20: #{tpu_custom_call.1} parent=11 // pred_fallthru
          _
      $region12: #{tpu_custom_call.1} parent=5 // pred_fallthru
        _
      %p179 = scmp.lt.s32.totalorder %s16, 2
      // Predicated region
      $region21: #{tpu_custom_call.1} parent=5 // pred_check
        %p180 = pneg %p179
      $region22: #{tpu_custom_call.1} parent=5 // pred_check_branch
        %182 = sbr.rel (%p180) target = $region24
      $region23: #{tpu_custom_call.1} parent=5 // pred_region
        // Predicated region
        $region25: #{tpu_custom_call.1} parent=23 // pred_check
          %p183 = pneg %p50
        $region26: #{tpu_custom_call.1} parent=23 // pred_check_branch
          %185 = sbr.rel (%p183) target = $region28
        $region27: #{tpu_custom_call.1} parent=23 // pred_region
          %s186 = sand.u32 %s40, 1
          %s187 = scalar_lea.sflag [#allocation3], %s186
          %s188 = sand.u32 %s40, 1
          %s189 = smul.addr %s188, 8
          %s190 = scalar_lea.vmem [#allocation2], %s189
          %s192 = ssub.s32 128, 128
          %193 = vsyncadd %s187, %s192
          %s194 = smul.addr %s23, 4
          %s195 = smul.addr %s24, 4
          %s196 = sadd.s32 %s194, %s195
          %s197 = smul.addr %s196, 32
          %s198 = scalar_lea.hbm %s0, %s197
          %s200 = sshll.u32 %s190, 4
          %s201 = int_to_ptr.vmem [resolvable:$true] %s200
          %203 = dma.hbm_to_vmem [thread:$0]  %s198, 128, %s201, %s187
        $region28: #{tpu_custom_call.1} parent=23 // pred_fallthru
          _
      $region24: #{tpu_custom_call.1} parent=5 // pred_fallthru
        _
      %p204 = scmp.le.s32.totalorder 1, %s16
      %p205 = scmp.lt.s32.totalorder %s16, 3
      %p206 = pnand %p204, %p205
      %p207 = pneg %p206
      // Predicated region
      $region29: #{tpu_custom_call.1} parent=5 // pred_check
        _
      $region30: #{tpu_custom_call.1} parent=5 // pred_check_branch
        %209 = sbr.rel (%p206) target = $region32
      $region31: #{tpu_custom_call.1} parent=5 // pred_region
        %s210 = ssub.s32 %s16, 1
        %s211 = sand.u32 %s43, 1
        %s212 = scalar_lea.sflag [#allocation3], %s211
        %s213 = sand.u32 %s43, 1
        %s214 = smul.addr %s213, 8
        %s215 = scalar_lea.vmem [#allocation2], %s214
        // Predicated region
        $region33: #{tpu_custom_call.1} parent=31 // pred_check
          %p216 = pneg %p56
        $region34: #{tpu_custom_call.1} parent=31 // pred_check_branch
          %218 = sbr.rel (%p216) target = $region36
        $region35: #{tpu_custom_call.1} parent=31 // pred_region
          %219 = dma.done %s212, 128
        $region36: #{tpu_custom_call.1} parent=31 // pred_fallthru
          _
        // Predicated region
        $region37: #{tpu_custom_call.1} parent=31 // pred_check
          %p220 = pneg %p82
        $region38: #{tpu_custom_call.1} parent=31 // pred_check_branch
          %222 = sbr.rel (%p220) target = $region40
        $region39: #{tpu_custom_call.1} parent=31 // pred_region
          %223 = dma.done [#allocation6], 128
        $region40: #{tpu_custom_call.1} parent=31 // pred_fallthru
          _
        // Predicated region
        $region41: #{tpu_custom_call.1} parent=31 // pred_check
          %p224 = pneg %p108
        $region42: #{tpu_custom_call.1} parent=31 // pred_check_branch
          %226 = sbr.rel (%p224) target = $region44
        $region43: #{tpu_custom_call.1} parent=31 // pred_region
          %227 = dma.done [#allocation6], 128
        $region44: #{tpu_custom_call.1} parent=31 // pred_fallthru
          _
        %s228 = sand.u32 %s43, 1
        %s229 = scalar_lea.sflag [#allocation3], %s228
        %s230 = sand.u32 %s43, 1
        %s231 = smul.addr %s230, 8
        %s232 = scalar_lea.vmem [#allocation2], %s231
        %p233 = pneg %p56
        %p234 = pneg %p53
        %p235 = pneg %p82
        %p236 = pneg %p79
        %p237 = pneg %p108
        %p238 = pneg %p105
        %p239 = pneg %p136
        %p240 = pneg %p133
        %s241 = sand.u32 %s123, 1
        %s242 = scalar_lea.sflag [#allocation4], %s241
        %s243 = sand.u32 %s123, 1
        %s244 = smul.addr %s243, 8
        %s245 = scalar_lea.vmem [#allocation8], %s244
        %v246 = vld [vmem:[%s215] sm:$0xff]
        %v248 = vcombine.high %v246, %v246
        %v250 = vunpack.c.l.s4 1983009808
        %v251 = vunpack.c.0.s8 %v250
        %v252 = vlaneseq
        %v253 = vshrl.u32 %v252, 7
        %v254 = vsub.s32 %v251, %v253
        %v255 = vrot.slane %v246, %v254
        %v257 = vunpack.c.l.s4 1983009808
        %v258 = vunpack.c.0.s8 %v257
        %v259 = vlaneseq
        %v260 = vshrl.u32 %v259, 7
        %v261 = vsub.s32 %v258, %v260
        %v262 = vrot.slane %v248, %v261
        %v263 = vcombine.high %v255, %v255
        %v264 = vcombine.high %v262, %v262
        %vm269 = vcmask 1041408
        %v270 = vsel %vm269, %v255, 0.0
        %v271 = vsel %vm269, %v263, 0.0
        %v272 = vadd.f32 %v270, %v271
        %v273 = vsel %vm269, %v262, 0.0
        %v274 = vadd.f32 %v272, %v273
        %v275 = vsel %vm269, %v264, 0.0
        %v276 = vadd.f32 %v274, %v275
        %277 = vadd.xlane.f32.xlu0 %v276
        %v278 = vpop.xlane.xlu0 %277
        %v279 = vmul.f32 %v246, %v246
        %v281 = vcombine.high %v279, %v279
        %v283 = vunpack.c.l.s4 1983009808
        %v284 = vunpack.c.0.s8 %v283
        %v285 = vlaneseq
        %v286 = vshrl.u32 %v285, 7
        %v287 = vsub.s32 %v284, %v286
        %v288 = vrot.slane %v279, %v287
        %v290 = vunpack.c.l.s4 1983009808
        %v291 = vunpack.c.0.s8 %v290
        %v292 = vlaneseq
        %v293 = vshrl.u32 %v292, 7
        %v294 = vsub.s32 %v291, %v293
        %v295 = vrot.slane %v281, %v294
        %v296 = vcombine.high %v288, %v288
        %v297 = vcombine.high %v295, %v295
        %v302 = vsel %vm269, %v288, 0.0
        %v303 = vsel %vm269, %v296, 0.0
        %v304 = vadd.f32 %v302, %v303
        %v305 = vsel %vm269, %v295, 0.0
        %v306 = vadd.f32 %v304, %v305
        %v307 = vsel %vm269, %v297, 0.0
        %v308 = vadd.f32 %v306, %v307
        %309 = vadd.xlane.f32.xlu0 %v308
        %v310 = vpop.xlane.xlu0 %309
        %v311 = vmul.f32 %v278, 0.001953125
        %v312 = vmul.f32 %v311, %v278
        %v313 = vsub.f32 %v310, %v312
        %v314 = vmul.f32 %v313, 0.0019569471
        %v315 = vmax.f32 %v314, 0.0
        %v316 = vadd.f32 %v315, 1e-05
        %v317 = vrsqrt.pop %v316
        %v318 = vld [vmem:[#allocation5] sm:$0xff]
        %v319 = vld [vmem:[#allocation7] sm:$0xff]
        %v321 = vcombine.high %v318, %v318
        %v323 = vunpack.c.l.s4 1983009808
        %v324 = vunpack.c.0.s8 %v323
        %v325 = vlaneseq
        %v326 = vshrl.u32 %v325, 7
        %v327 = vsub.s32 %v324, %v326
        %v328 = vrot.slane %v318, %v327
        %v330 = vunpack.c.l.s4 1983009808
        %v331 = vunpack.c.0.s8 %v330
        %v332 = vlaneseq
        %v333 = vshrl.u32 %v332, 7
        %v334 = vsub.s32 %v331, %v333
        %v335 = vrot.slane %v321, %v334
        %v336 = vcombine.high %v328, %v328
        %v337 = vcombine.high %v335, %v335
        %v342 = vmul.f32 %v317, %v328
        %v343 = vmul.f32 %v317, %v336
        %v344 = vmul.f32 %v317, %v335
        %v345 = vmul.f32 %v317, %v337
        %v346 = vmul.f32 %v311, %v342
        %v347 = vmul.f32 %v311, %v343
        %v348 = vmul.f32 %v311, %v344
        %v349 = vmul.f32 %v311, %v345
        %v354 = vcombine.low %v346, %v347
        %v355 = vcombine.low %v348, %v349
        %v357 = vunpack.c.l.s4 1983009808
        %v358 = vunpack.c.0.s8 %v357
        %v359 = vlaneseq
        %v360 = vshrl.u32 %v359, 7
        %v361 = vsub.s32 %v358, %v360
        %v362 = vrot.slane %v354, %v361
        %v364 = vunpack.c.l.s4 1983009808
        %v365 = vunpack.c.0.s8 %v364
        %v366 = vlaneseq
        %v367 = vshrl.u32 %v366, 7
        %v368 = vsub.s32 %v365, %v367
        %v369 = vrot.slane %v355, %v368
        %v370 = vcombine.low %v362, %v369
        %v372 = vsub.f32 %v319, %v370
        %v377 = vcombine.low %v342, %v343
        %v378 = vcombine.low %v344, %v345
        %v380 = vunpack.c.l.s4 1983009808
        %v381 = vunpack.c.0.s8 %v380
        %v382 = vlaneseq
        %v383 = vshrl.u32 %v382, 7
        %v384 = vsub.s32 %v381, %v383
        %v385 = vrot.slane %v377, %v384
        %v387 = vunpack.c.l.s4 1983009808
        %v388 = vunpack.c.0.s8 %v387
        %v389 = vlaneseq
        %v390 = vshrl.u32 %v389, 7
        %v391 = vsub.s32 %v388, %v390
        %v392 = vrot.slane %v378, %v391
        %v393 = vcombine.low %v385, %v392
        %v395 = vmul.f32 %v246, %v393
        %v396 = vadd.f32 %v395, %v372
        %397 = vst [vmem:[%s245] sm:$0xff] %v396
        %s398 = sand.u32 %s123, 1
        %s399 = scalar_lea.sflag [#allocation4], %s398
        %s400 = sand.u32 %s123, 1
        %s401 = smul.addr %s400, 8
        %s402 = scalar_lea.vmem [#allocation8], %s401
        // Predicated region
        $region45: #{tpu_custom_call.1} parent=31 // pred_check
          %p403 = pneg %p133
        $region46: #{tpu_custom_call.1} parent=31 // pred_check_branch
          %405 = sbr.rel (%p403) target = $region48
        $region47: #{tpu_custom_call.1} parent=31 // pred_region
          %s407 = ssub.s32 128, 128
          %408 = vsyncadd %s399, %s407
          %s409 = smul.addr %s25, 4
          %s410 = smul.addr %s26, 4
          %s411 = sadd.s32 %s409, %s410
          %s412 = smul.addr %s411, 32
          %s413 = scalar_lea.hbm %s3, %s412
          %s415 = sshll.u32 %s402, 4
          %s416 = int_to_ptr.vmem [resolvable:$true] %s415
          %418 = dma.vmem_to_hbm [thread:$0]  %s416, 128, %s413, %s399
        $region48: #{tpu_custom_call.1} parent=31 // pred_fallthru
          _
      $region32: #{tpu_custom_call.1} parent=5 // pred_fallthru
        _
      %p419 = scmp.le.s32.totalorder 2, %s16
      // Predicated region
      $region49: #{tpu_custom_call.1} parent=5 // pred_check
        %p420 = pneg %p419
      $region50: #{tpu_custom_call.1} parent=5 // pred_check_branch
        %422 = sbr.rel (%p420) target = $region52
      $region51: #{tpu_custom_call.1} parent=5 // pred_region
        %s423 = ssub.s32 %s16, 2
        // Predicated region
        $region53: #{tpu_custom_call.1} parent=51 // pred_check
          %p424 = pneg %p139
        $region54: #{tpu_custom_call.1} parent=51 // pred_check_branch
          %426 = sbr.rel (%p424) target = $region56
        $region55: #{tpu_custom_call.1} parent=51 // pred_region
          %s427 = sand.u32 %s124, 1
          %s428 = scalar_lea.sflag [#allocation4], %s427
          %s429 = sand.u32 %s124, 1
          %s430 = smul.addr %s429, 8
          %s431 = scalar_lea.vmem [#allocation8], %s430
          %432 = dma.done %s428, 128
        $region56: #{tpu_custom_call.1} parent=51 // pred_fallthru
          _
      $region52: #{tpu_custom_call.1} parent=5 // pred_fallthru
        _
    $region6: #{tpu_custom_call.1} parent=1 // loop_footer
      %s20 = sadd.s32 1, %s16
    $region7: #{tpu_custom_call.1} parent=1 // loop_footer_branch
      %15 = sbr.rel target = $region3
    $region8: #{tpu_custom_call.1} parent=1 // loop_exit
      _
    %433 = vsyncpa [#allocation3], 1
    %s434 = scalar_lea.sflag [#allocation3], 1
    %435 = vsyncpa %s434, 1
    %436 = vsyncpa [#allocation6], 1
    %437 = vsyncpa [#allocation4], 1
    %s438 = scalar_lea.sflag [#allocation4], 1
    %439 = vsyncpa %s438, 1

</llo_original>
